<compile_context>
chip_gen: v7x
topology: tpu7x:2x2x1
jax: 0.10.0
libtpu: 0.0.40
codegen_flags: <defaults>
</compile_context>

<pallas_src>
import functools
import math

import jax
import jax.numpy as jnp
from jax.experimental import pallas as pl
from jax.experimental.pallas import tpu as pltpu

_LANES = 128


def _cdiv(a, b):
    return -(-a // b)


def _round_up(x, m):
    return _cdiv(x, m) * m


def _sublane_multiple(dtype):
    # Second-minor block dim multiple per dtype packing (f32:8, bf16:16, int8:32).
    return {4: 8, 2: 16, 1: 32}.get(jnp.dtype(dtype).itemsize, 8)


def _default_nsplit():
    # The leading "parallel" grid axis only pays off on multi-TensorCore chips
    # (v7x: 2 TCs/chip).  On v5e/v6e (or CPU interpret) it just duplicates the
    # finalize work, so default to 1 there.
    try:
        dev = jax.devices()[0]
        if dev.platform == "tpu" and "v7" in str(getattr(dev, "device_kind", "")).lower():
            return 2
    except Exception:
        pass
    return 1


def _as_rows128(x):
    """View x as a lane-dense (rows, 128) slab; copy only if numel % 128 != 0."""
    flat = x.reshape(-1)
    n = flat.shape[0]
    rows = _cdiv(n, _LANES)
    padded = rows * _LANES
    if padded != n:
        # Only the <128-element flat tail forces a pad; zero padding is exact
        # for both the SSE term and the KL term (1 + 0 - 0 - exp(0) == 0).
        flat = jnp.pad(flat, (0, padded - n))
    return flat.reshape(rows, _LANES), rows


def _vae_loss_kernel(dec_ref, tgt_ref, mu_ref, lv_ref, out_ref, acc_ref, *,
                     inv_n, n_tiles, tile_r, valid_rows, needs_mask, single_split):
    # NOTE: grid axis 1 (tiles) MUST remain the innermost, sequentially iterated
    # ("arbitrary") axis -- the scratch-accumulator init/finalize relies on it.
    #
    # All program_id reads happen here, at the top level (never inside pl.when
    # bodies); the derived scalars are closed over into the branches.
    c = pl.program_id(0)                 # split / TensorCore shard ("parallel")
    t = pl.program_id(1)                 # tile within the split ("arbitrary")
    is_first_tile = t == 0
    is_last_tile = t == n_tiles - 1      # static trip count, no pl.num_programs
    is_split0 = c == 0

    @pl.when(is_first_tile)
    def _init():
        acc_ref[...] = jnp.zeros_like(acc_ref)

    # Per-tile elementwise squared error, reduced to a single (8,128) vreg of
    # partial sums: 2 vld per data vreg, pure VPU adds, hidden under the DMA.
    d = dec_ref[...].astype(jnp.float32)
    g = tgt_ref[...].astype(jnp.float32)
    sq = (d - g) * (d - g)
    if needs_mask:
        # Zero rows past the end of the real data (ragged last tile and any
        # clamped fully-out-of-range tiles).  valid_rows is a Python int.
        row_start = (c * n_tiles + t) * tile_r
        gid = jax.lax.broadcasted_iota(jnp.int32, (tile_r, _LANES), 0) + row_start
        sq = jnp.where(gid < valid_rows, sq, 0.0)
    acc_ref[...] += sq.reshape(tile_r // 8, 8, _LANES).sum(axis=0)

    @pl.when(is_last_tile)
    def _finalize():
        sse = jnp.sum(acc_ref[...])      # one cross-lane reduce per split
        out_ref[0, 0] = sse * jnp.float32(inv_n)

        def _kl_term():
            mu = mu_ref[...].astype(jnp.float32)
            lv = lv_ref[...].astype(jnp.float32)
            kld = -0.5 * jnp.sum(1.0 + lv - mu * mu - jnp.exp(lv))
            out_ref[0, 0] += kld * jnp.float32(inv_n)

        if single_split:
            _kl_term()
        else:
            # Only split 0 contributes the KL term (skips the exp + reduce on
            # the other core).  is_split0 was computed at the top level.
            pl.when(is_split0)(_kl_term)


def vae_loss(decoded, target, mu, logvar, *, nsplit=None, max_tile_rows=1024):
    """Scalar VAE loss = MSE(decoded, target) + KLD / numel(decoded)."""
    assert decoded.shape == target.shape, "decoded/target shape mismatch"
    assert mu.shape == logvar.shape, "mu/logvar shape mismatch"

    numel = math.prod(decoded.shape)
    lat_numel = math.prod(mu.shape)
    inv_n = 1.0 / float(numel)

    if nsplit is None:
        nsplit = _default_nsplit()

    sub = _sublane_multiple(decoded.dtype)

    dec2d, rows = _as_rows128(decoded)
    tgt2d, _ = _as_rows128(target)
    mu2d, m_rows = _as_rows128(mu)       # tiny; any pad copy here is negligible
    lv2d, _ = _as_rows128(logvar)

    # ---- tiling plan: minimize dead / padded rows ----
    nsplit = max(1, min(int(nsplit), _cdiv(rows, sub)))   # don't oversplit tiny inputs
    rows_per_split = _cdiv(rows, nsplit)
    n_tiles = _cdiv(rows_per_split, max_tile_rows)
    tile_r = _round_up(_cdiv(rows_per_split, n_tiles), sub)
    n_tiles_data = _cdiv(rows, tile_r)                    # tiles that actually hold data
    needs_mask = (nsplit * n_tiles * tile_r) != rows
    assert tile_r % 8 == 0

    if nsplit * n_tiles > n_tiles_data:
        # Some logical (split, tile) slots fall entirely past the data: clamp
        # their block index (the pipeline skips the duplicate fetch since the
        # block index repeats) and let the in-kernel row mask zero them out.
        def data_map(c, t, _n=n_tiles, _last=n_tiles_data - 1):
            return (jnp.minimum(c * _n + t, _last), 0)
    else:
        def data_map(c, t, _n=n_tiles):
            return (c * _n + t, 0)

    kernel = functools.partial(
        _vae_loss_kernel,
        inv_n=inv_n, n_tiles=n_tiles, tile_r=tile_r, valid_rows=rows,
        needs_mask=needs_mask, single_split=(nsplit == 1),
    )

    grid_spec = pltpu.PrefetchScalarGridSpec(
        num_scalar_prefetch=0,
        grid=(nsplit, n_tiles),
        in_specs=[
            pl.BlockSpec((tile_r, _LANES), data_map),
            pl.BlockSpec((tile_r, _LANES), data_map),
            # mu/logvar: tiny, constant block index -> fetched once, resident.
            pl.BlockSpec((m_rows, _LANES), lambda c, t: (0, 0)),
            pl.BlockSpec((m_rows, _LANES), lambda c, t: (0, 0)),
        ],
        out_specs=pl.BlockSpec((1, 1), lambda c, t: (c, 0), memory_space=pltpu.SMEM),
        scratch_shapes=[pltpu.VMEM((8, _LANES), jnp.float32)],
    )

    itemsize = jnp.dtype(decoded.dtype).itemsize
    lat_itemsize = jnp.dtype(mu.dtype).itemsize
    cost = pl.CostEstimate(
        flops=3 * numel + 6 * lat_numel,
        transcendentals=lat_numel,
        bytes_accessed=(dec2d.size + tgt2d.size) * itemsize
        + (mu2d.size + lv2d.size) * lat_itemsize + nsplit * 4,
    )

    partials = pl.pallas_call(
        kernel,
        out_shape=jax.ShapeDtypeStruct((nsplit, 1), jnp.float32),
        grid_spec=grid_spec,
        compiler_params=pltpu.CompilerParams(
            dimension_semantics=("parallel", "arbitrary"),
            vmem_limit_bytes=32 * 1024 * 1024,   # ~2 MiB used; explicit budget
        ),
        cost_estimate=cost,
    )(dec2d, tgt2d, mu2d, lv2d)

    # nsplit tiny per-core partial losses -> scalar.
    return jnp.sum(partials)


def vae_loss_ref(decoded, target, mu, logvar):
    """Pure-JAX reference matching the PyTorch module."""
    n = decoded.size
    bce = jnp.mean((decoded.astype(jnp.float32) - target.astype(jnp.float32)) ** 2)
    kld = -0.5 * jnp.sum(
        1.0 + logvar.astype(jnp.float32)
        - mu.astype(jnp.float32) ** 2
        - jnp.exp(logvar.astype(jnp.float32))
    )
    return bce + kld / n


def _check(shape, latent, key, **kw):
    k1, k2, k3, k4 = jax.random.split(key, 4)
    b = shape[0]
    decoded = jax.random.normal(k1, shape, dtype=jnp.float32)
    target = jax.random.normal(k2, shape, dtype=jnp.float32)
    mu = jax.random.normal(k3, (b, latent), dtype=jnp.float32) * 0.5
    logvar = jax.random.normal(k4, (b, latent), dtype=jnp.float32) * 0.1

    loss = jax.block_until_ready(vae_loss(decoded, target, mu, logvar, **kw))
    ref = jax.block_until_ready(vae_loss_ref(decoded, target, mu, logvar))
    assert jnp.allclose(loss, ref, rtol=2e-5, atol=2e-5), (shape, kw, loss, ref)
    return loss


if __name__ == "__main__":
    key = jax.random.PRNGKey(0)
    k0, k1, k2, k3 = jax.random.split(key, 4)

    # Primary VAE-like shape: decoded/target NCHW, mu/logvar (B, latent).
    # numel = 2048 -> clean (16, 128) view, no wrapper-side copy at all.
    _check((2, 4, 16, 16), 32, k0)
    # Odd shape: numel % 128 != 0 -> tail-pad fallback path.
    _check((2, 3, 17, 19), 40, k1)
    # Multi-tile path with a ragged last tile (rows=20, tile_r=8) -> in-kernel mask.
    _check((2, 5, 16, 16), 32, k2, max_tile_rows=8)
    # Two-split (v7x-style) path incl. a clamped fully-out-of-range tile.
    _check((2, 5, 16, 16), 32, k3, nsplit=2, max_tile_rows=8)

    print("KERNEL_OK")
</pallas_src>

<mosaic_0001>
module attributes {stable_mosaic.version = 11 : i64} {
  func.func @_vae_loss_kernel(%arg0: i32, %arg1: i32, %arg2: memref<16x128xf32, #tpu.memory_space<vmem>>, %arg3: memref<16x128xf32, #tpu.memory_space<vmem>>, %arg4: memref<1x128xf32, #tpu.memory_space<vmem>>, %arg5: memref<1x128xf32, #tpu.memory_space<vmem>>, %arg6: memref<1x1xf32, #tpu.memory_space<smem>>, %arg7: memref<8x128xf32, #tpu.memory_space<vmem>>) attributes {dimension_semantics = [#tpu.dimension_semantics<parallel>, #tpu.dimension_semantics<arbitrary>], iteration_bounds = array<i64: 1, 1>, scalar_prefetch = 0 : i64, scratch_operands = 1 : i64, tpu.core_type = #tpu.core_type<tc>, window_params = [{transform_indices = @transform_0, window_bounds = array<i64: 16, 128>}, {transform_indices = @transform_1, window_bounds = array<i64: 16, 128>}, {pipeline_mode = #tpu.pipeline_mode<synchronous>, transform_indices = @transform_2, window_bounds = array<i64: 1, 128>}, {pipeline_mode = #tpu.pipeline_mode<synchronous>, transform_indices = @transform_3, window_bounds = array<i64: 1, 128>}, {transform_indices = @transform_4, window_bounds = array<i64: 1, 1>}]} {
    %c0_i32 = arith.constant 0 : i32
    %0 = arith.cmpi eq, %arg1, %c0_i32 : i32
    %c0_i32_0 = arith.constant 0 : i32
    %1 = arith.cmpi eq, %arg1, %c0_i32_0 : i32
    %2 = arith.extui %0 : i1 to i32
    %c0_i32_1 = arith.constant 0 : i32
    %3 = arith.cmpi ne, %2, %c0_i32_1 : i32
    scf.if %3 {
      %cst_10 = arith.constant 0.000000e+00 : f32
      %16 = vector.broadcast %cst_10 : f32 to vector<8x128xf32>
      %c0_11 = arith.constant 0 : index
      %c0_12 = arith.constant 0 : index
      %17 = vector.load %arg7[%c0_11, %c0_12] : memref<8x128xf32, #tpu.memory_space<vmem>>, vector<8x128xf32>
      tpu.vector_store %arg7[%c0_11, %c0_12], %16 {strides = array<i32>} : memref<8x128xf32, #tpu.memory_space<vmem>>, vector<8x128xf32>,
    } else {
    }
    %c0 = arith.constant 0 : index
    %c0_2 = arith.constant 0 : index
    %4 = vector.load %arg2[%c0, %c0_2] : memref<16x128xf32, #tpu.memory_space<vmem>>, vector<16x128xf32>
    %c0_3 = arith.constant 0 : index
    %c0_4 = arith.constant 0 : index
    %5 = vector.load %arg3[%c0_3, %c0_4] : memref<16x128xf32, #tpu.memory_space<vmem>>, vector<16x128xf32>
    %6 = arith.subf %4, %5 : vector<16x128xf32>
    %7 = arith.subf %4, %5 : vector<16x128xf32>
    %8 = arith.mulf %6, %7 : vector<16x128xf32>
    %c0_5 = arith.constant 0 : index
    %c0_6 = arith.constant 0 : index
    %9 = vector.load %arg7[%c0_5, %c0_6] : memref<8x128xf32, #tpu.memory_space<vmem>>, vector<8x128xf32>
    %10 = vector.shape_cast %8 : vector<16x128xf32> to vector<2x8x128xf32>
    %cst = arith.constant dense<0.000000e+00> : vector<8x128xf32>
    %11 = vector.multi_reduction <add>, %10, %cst [0] : vector<2x8x128xf32> to vector<8x128xf32>
    %12 = arith.addf %9, %11 : vector<8x128xf32>
    %c0_7 = arith.constant 0 : index
    %c0_8 = arith.constant 0 : index
    %13 = vector.load %arg7[%c0_7, %c0_8] : memref<8x128xf32, #tpu.memory_space<vmem>>, vector<8x128xf32>
    tpu.vector_store %arg7[%c0_7, %c0_8], %12 {strides = array<i32>} : memref<8x128xf32, #tpu.memory_space<vmem>>, vector<8x128xf32>,
    %14 = arith.extui %1 : i1 to i32
    %c0_i32_9 = arith.constant 0 : i32
    %15 = arith.cmpi ne, %14, %c0_i32_9 : i32
    scf.if %15 {
      %c0_10 = arith.constant 0 : index
      %c0_11 = arith.constant 0 : index
      %16 = vector.load %arg7[%c0_10, %c0_11] : memref<8x128xf32, #tpu.memory_space<vmem>>, vector<8x128xf32>
      %17 = vector.shape_cast %16 : vector<8x128xf32> to vector<1x8x128xf32>
      %cst_12 = arith.constant dense<0.000000e+00> : vector<1xf32>
      %18 = vector.multi_reduction <add>, %17, %cst_12 [1, 2] : vector<1x8x128xf32> to vector<1xf32>
      %19 = vector.shape_cast %18 : vector<1xf32> to vector<1x1x1xf32>
      %20 = vector.extract %19[0, 0, 0] : f32 from vector<1x1x1xf32>
      %cst_13 = arith.constant 4.8828125E-4 : f32
      %21 = arith.mulf %20, %cst_13 : f32
      %c0_14 = arith.constant 0 : index
      %c0_15 = arith.constant 0 : index
      %22 = memref.load %arg6[%c0_14, %c0_15] : memref<1x1xf32, #tpu.memory_space<smem>>
      memref.store %21, %arg6[%c0_14, %c0_15] : memref<1x1xf32, #tpu.memory_space<smem>>
      %c0_16 = arith.constant 0 : index
      %c0_17 = arith.constant 0 : index
      %23 = vector.load %arg4[%c0_16, %c0_17] : memref<1x128xf32, #tpu.memory_space<vmem>>, vector<1x128xf32>
      %c0_18 = arith.constant 0 : index
      %c0_19 = arith.constant 0 : index
      %24 = vector.load %arg5[%c0_18, %c0_19] : memref<1x128xf32, #tpu.memory_space<vmem>>, vector<1x128xf32>
      %cst_20 = arith.constant 1.000000e+00 : f32
      %25 = vector.broadcast %cst_20 : f32 to vector<1x128xf32>
      %26 = arith.addf %25, %24 : vector<1x128xf32>
      %27 = arith.mulf %23, %23 : vector<1x128xf32>
      %28 = arith.subf %26, %27 : vector<1x128xf32>
      %29 = math.exp %24 : vector<1x128xf32>
      %30 = arith.subf %28, %29 : vector<1x128xf32>
      %31 = vector.shape_cast %30 : vector<1x128xf32> to vector<1x1x128xf32>
      %cst_21 = arith.constant dense<0.000000e+00> : vector<1xf32>
      %32 = vector.multi_reduction <add>, %31, %cst_21 [1, 2] : vector<1x1x128xf32> to vector<1xf32>
      %33 = vector.shape_cast %32 : vector<1xf32> to vector<1x1x1xf32>
      %34 = vector.extract %33[0, 0, 0] : f32 from vector<1x1x1xf32>
      %cst_22 = arith.constant -5.000000e-01 : f32
      %35 = arith.mulf %cst_22, %34 : f32
      %c0_23 = arith.constant 0 : index
      %c0_24 = arith.constant 0 : index
      %36 = memref.load %arg6[%c0_23, %c0_24] : memref<1x1xf32, #tpu.memory_space<smem>>
      %cst_25 = arith.constant 4.8828125E-4 : f32
      %37 = arith.mulf %35, %cst_25 : f32
      %38 = arith.addf %36, %37 : f32
      %c0_26 = arith.constant 0 : index
      %c0_27 = arith.constant 0 : index
      %39 = memref.load %arg6[%c0_26, %c0_27] : memref<1x1xf32, #tpu.memory_space<smem>>
      memref.store %38, %arg6[%c0_26, %c0_27] : memref<1x1xf32, #tpu.memory_space<smem>>
    } else {
    }
    return
  }
  func.func @transform_0(%arg0: i32, %arg1: i32) -> (i32, i32) {
    %c1_i32 = arith.constant 1 : i32
    %0 = arith.muli %arg0, %c1_i32 : i32
    %1 = arith.addi %0, %arg1 : i32
    %c0_i32 = arith.constant 0 : i32
    %c0_i32_0 = arith.constant 0 : i32
    return %1, %c0_i32 : i32, i32
  }
  func.func @transform_1(%arg0: i32, %arg1: i32) -> (i32, i32) {
    %c1_i32 = arith.constant 1 : i32
    %0 = arith.muli %arg0, %c1_i32 : i32
    %1 = arith.addi %0, %arg1 : i32
    %c0_i32 = arith.constant 0 : i32
    %c0_i32_0 = arith.constant 0 : i32
    return %1, %c0_i32 : i32, i32
  }
  func.func @transform_2(%arg0: i32, %arg1: i32) -> (i32, i32) {
    %c0_i32 = arith.constant 0 : i32
    %c0_i32_0 = arith.constant 0 : i32
    %c0_i32_1 = arith.constant 0 : i32
    return %c0_i32, %c0_i32_0 : i32, i32
  }
  func.func @transform_3(%arg0: i32, %arg1: i32) -> (i32, i32) {
    %c0_i32 = arith.constant 0 : i32
    %c0_i32_0 = arith.constant 0 : i32
    %c0_i32_1 = arith.constant 0 : i32
    return %c0_i32, %c0_i32_0 : i32, i32
  }
  func.func @transform_4(%arg0: i32, %arg1: i32) -> (i32, i32) {
    %c0_i32 = arith.constant 0 : i32
    %c0_i32_0 = arith.constant 0 : i32
    return %arg0, %c0_i32 : i32, i32
  }
}

</mosaic_0001>

<llo_original>
// kernel: tpu_custom_call.1
$region0: #{tpu_custom_call.1}
  #allocation0 [shape = 'u32[]', space=smem, size = 0x4, offset = 0x4, fixed_abs, tag = 'smem constant byte address 0x4 - core index']
  #allocation1 [shape = 'u32[144,128]{1,0:T(1,128)}', space=vmem, size = 0x12000, scoped, tag = 'internal scratch']
  #allocation2 [shape = 'f32[8,128]{1,0:T(8,128)}', space=vmem, size = 0x1000, scoped, tag = 'scratch operand']
  %s0 = inlined_call_operand.hbm [shape: f32[16,128], index: 0, kind: input, shape index: {}]
  %s1 = inlined_call_operand.hbm [shape: f32[16,128], index: 1, kind: input, shape index: {}]
  %s2 = inlined_call_operand.vmem [shape: f32[1,128], index: 2, kind: input, shape index: {}]
  %s3 = inlined_call_operand.vmem [shape: f32[1,128], index: 3, kind: input, shape index: {}]
  %s4 = inlined_call_operand.hbm [shape: f32[1,1], index: 4, kind: output, shape index: {}]
  %s5 = sld [smem:[#allocation0]]
  $region42: #{tpu_custom_call.1} parent=0
    _
  %s7 = ssub.s32 1, %s5
  %s8 = scalar_select 0, %s7, %s5
  $region1: #{tpu_custom_call.1} parent=0
    #allocation3 [shape = 'u8[8192]{0}', space=vmem, size = 0x2000, scoped, tag = 'input window, operand 0, single buffered']
    #allocation4 [shape = 's32[1]{0}', space=sflag, size = 0x4, scoped, tag = 'scoped memory for tpu_custom_call.1']
    #allocation5 [shape = 's32[1]{0}', space=sflag, size = 0x4, scoped, tag = 'scoped memory for tpu_custom_call.1']
    #allocation6 [shape = 'u8[8192]{0}', space=vmem, size = 0x2000, scoped, tag = 'input window, operand 1, single buffered']
    #allocation7 [shape = 's32[1]{0}', space=sflag, size = 0x4, scoped, tag = 'scoped memory for tpu_custom_call.1']
    #allocation8 [shape = 'u8[512]{0}', space=smem, size = 0x200, scoped, tag = 'output window, operand 0, single buffered']
    %9 = vsyncpa [#allocation4], 0
    %10 = vsyncpa [#allocation7], 0
    %11 = vsyncpa [#allocation5], 0
    // Predicated region
    $region2: #{tpu_custom_call.1} parent=1 // pred_check
      _
    $region3: #{tpu_custom_call.1} parent=1 // pred_check_branch
      %13 = sbr.rel (0) target = $region5
    $region4: #{tpu_custom_call.1} parent=1 // pred_region
      %s14 = sadd.s32 0, 0
      %s15 = smul.u32 2, %s14
      %s17 = ssub.s32 256, 256
      %18 = vsyncadd [#allocation4], %s17
      %s19 = smul.addr %s15, 128
      %s20 = scalar_lea.hbm %s0, %s19
      %s21 = sshll.u32 [#allocation3], 4
      %s22 = int_to_ptr.vmem [resolvable:$true] %s21
      %27 = dma.hbm_to_vmem [thread:$0]  %s20, 256, %s22, [#allocation4], 128, 128, 8
    $region5: #{tpu_custom_call.1} parent=1 // pred_fallthru
      _
    // Predicated region
    $region6: #{tpu_custom_call.1} parent=1 // pred_check
      _
    $region7: #{tpu_custom_call.1} parent=1 // pred_check_branch
      %29 = sbr.rel (0) target = $region9
    $region8: #{tpu_custom_call.1} parent=1 // pred_region
      %s30 = sadd.s32 0, 0
      %s31 = smul.u32 2, %s30
      %s33 = ssub.s32 256, 256
      %34 = vsyncadd [#allocation7], %s33
      %s35 = smul.addr %s31, 128
      %s36 = scalar_lea.hbm %s1, %s35
      %s37 = sshll.u32 [#allocation6], 4
      %s38 = int_to_ptr.vmem [resolvable:$true] %s37
      %43 = dma.hbm_to_vmem [thread:$0]  %s36, 256, %s38, [#allocation7], 128, 128, 8
    $region9: #{tpu_custom_call.1} parent=1 // pred_fallthru
      _
    // Predicated region
    $region10: #{tpu_custom_call.1} parent=1 // pred_check
      _
    $region11: #{tpu_custom_call.1} parent=1 // pred_check_branch
      %45 = sbr.rel (0) target = $region13
    $region12: #{tpu_custom_call.1} parent=1 // pred_region
      _
    $region13: #{tpu_custom_call.1} parent=1 // pred_fallthru
      _
    // Predicated region
    $region14: #{tpu_custom_call.1} parent=1 // pred_check
      _
    $region15: #{tpu_custom_call.1} parent=1 // pred_check_branch
      %47 = sbr.rel (0) target = $region17
    $region16: #{tpu_custom_call.1} parent=1 // pred_region
      _
    $region17: #{tpu_custom_call.1} parent=1 // pred_fallthru
      _
    // Predicated region
    $region18: #{tpu_custom_call.1} parent=1 // pred_check
      _
    $region19: #{tpu_custom_call.1} parent=1 // pred_check_branch
      %49 = sbr.rel (0) target = $region21
    $region20: #{tpu_custom_call.1} parent=1 // pred_region
      %50 = dma.done [#allocation4], 256
    $region21: #{tpu_custom_call.1} parent=1 // pred_fallthru
      _
    // Predicated region
    $region22: #{tpu_custom_call.1} parent=1 // pred_check
      _
    $region23: #{tpu_custom_call.1} parent=1 // pred_check_branch
      %52 = sbr.rel (0) target = $region25
    $region24: #{tpu_custom_call.1} parent=1 // pred_region
      %53 = dma.done [#allocation7], 256
    $region25: #{tpu_custom_call.1} parent=1 // pred_fallthru
      _
    %s54 = sadd.s32 0, 0
    %s55 = smul.u32 2, %s54
    %s56 = sadd.s32 0, 0
    %s57 = smul.u32 2, %s56
    %p58 = scmp.eq.s32.totalorder 0, 0
    // Predicated region
    $region26: #{tpu_custom_call.1} parent=1 // pred_check
      %p59 = pneg %p58
    $region27: #{tpu_custom_call.1} parent=1 // pred_check_branch
      %61 = sbr.rel (%p59) target = $region29
    $region28: #{tpu_custom_call.1} parent=1 // pred_region
      %62 = vst [vmem:[#allocation2] sm:$0xff] 0.0
    $region29: #{tpu_custom_call.1} parent=1 // pred_fallthru
      _
    %v63 = vld [vmem:[#allocation3] sm:$0xff]
    %v64 = vld [vmem:[#allocation3 + $0x8] sm:$0xff]
    %v65 = vld [vmem:[#allocation6] sm:$0xff]
    %v66 = vld [vmem:[#allocation6 + $0x8] sm:$0xff]
    %v67 = vsub.f32 %v63, %v65
    %v68 = vsub.f32 %v64, %v66
    %v69 = vmul.f32 %v67, %v67
    %v70 = vmul.f32 %v68, %v68
    %v71 = vld [vmem:[#allocation2] sm:$0xff]
    %v72 = vadd.f32 %v69, %v70
    %v73 = vadd.f32 %v71, %v72
    %74 = vst [vmem:[#allocation2] sm:$0xff] %v73
    // Predicated region
    $region30: #{tpu_custom_call.1} parent=1 // pred_check
      %p75 = pneg %p58
    $region31: #{tpu_custom_call.1} parent=1 // pred_check_branch
      %77 = sbr.rel (%p75) target = $region33
    $region32: #{tpu_custom_call.1} parent=1 // pred_region
      %v78 = vld [vmem:[#allocation2] sm:$0xff]
      %79 = vadd.xlane.f32.xlu0 %v78
      %v80 = vpop.xlane.xlu0 %79
      %v81 = vrot.slane %v80, 4
      %v82 = vadd.f32 %v80, %v81
      %v83 = vrot.slane %v82, 2
      %v84 = vadd.f32 %v82, %v83
      %v85 = vrot.slane %v84, 1
      %v86 = vadd.f32 %v84, %v85
      %s87 = vtos %v86
      %s88 = smul.f32 %s87, 0.00048828125
      %s89 = scalar_lea.smem [#allocation8], 0
      %90 = sst [smem:[%s89]] %s88
      %v91 = vld [vmem:[%s2] sm:$0x1]
      %v92 = vld [vmem:[%s3] sm:$0x1]
      %v93 = vadd.f32 %v92, 1.0
      %v94 = vmul.f32 %v91, %v91
      %v95 = vsub.f32 %v93, %v94
      %v96 = vmul.f32 %v92, 1.442695
      %v97 = vpow.pop %v96
      %v98 = vsub.f32 %v95, %v97
      %vm99 = vcmask 1040384
      %v100 = vsel %vm99, %v98, 0.0
      %101 = vadd.xlane.f32.xlu0 %v100
      %v102 = vpop.xlane.xlu0 %101
      %v103 = vrot.slane %v102, 4
      %v104 = vadd.f32 %v102, %v103
      %v105 = vrot.slane %v104, 2
      %v106 = vadd.f32 %v104, %v105
      %v107 = vrot.slane %v106, 1
      %v108 = vadd.f32 %v106, %v107
      %s109 = vtos %v108
      %s110 = smul.f32 %s109, -0.5
      %s111 = sld [smem:[#allocation8]]
      %s112 = smul.f32 %s110, 0.00048828125
      %s113 = sadd.f32 %s111, %s112
      %114 = sst [smem:[%s89]] %s113
    $region33: #{tpu_custom_call.1} parent=1 // pred_fallthru
      _
    // Predicated region
    $region34: #{tpu_custom_call.1} parent=1 // pred_check
      _
    $region35: #{tpu_custom_call.1} parent=1 // pred_check_branch
      %116 = sbr.rel (0) target = $region37
    $region36: #{tpu_custom_call.1} parent=1 // pred_region
      %s118 = ssub.s32 16, 16
      %119 = vsyncadd [#allocation5], %s118
      %122 = dma.smem_to_hbm [#allocation8], 16, %s4, [#allocation5]
    $region37: #{tpu_custom_call.1} parent=1 // pred_fallthru
      _
    // Predicated region
    $region38: #{tpu_custom_call.1} parent=1 // pred_check
      _
    $region39: #{tpu_custom_call.1} parent=1 // pred_check_branch
      %124 = sbr.rel (0) target = $region41
    $region40: #{tpu_custom_call.1} parent=1 // pred_region
      %125 = dma.done [#allocation5], 16
    $region41: #{tpu_custom_call.1} parent=1 // pred_fallthru
      _
    %126 = sfence
    %127 = vsyncpa [#allocation4], 1
    %128 = vsyncpa [#allocation7], 1
    %129 = vsyncpa [#allocation5], 1

</llo_original>
